<compile_context>
chip_gen: v7x
topology: tpu7x:2x2x1
jax: 0.10.0
libtpu: 0.0.40
codegen_flags: <defaults>
</compile_context>

<pallas_src>
import jax
import jax.numpy as jnp
from jax import lax
from jax.experimental import pallas as pl
from jax.experimental.pallas import tpu as pltpu

OBS_DIM = 5
HIDDEN = 128

_SUBLANE = 8    # f32 sublane granule
_LANE = 128     # lane width


def _cdiv(a, b):
    return (a + b - 1) // b


def _round_up(x, m):
    return _cdiv(x, m) * m


def value_kernel(x_ref, w1_ref, b1_ref, w2_ref, b2_ref, o_ref):
    # Layer 1 on the MXU: (TB, obs) @ (obs, HIDDEN), f32 accumulation.
    h = jnp.dot(x_ref[...], w1_ref[...], preferred_element_type=jnp.float32)
    h = jnp.maximum(h + b1_ref[...], 0.0)          # bias + ReLU on the VPU (f32, v5e-safe)
    # Layer 2 as an NT contraction against the (1, HIDDEN) weight row:
    #   (1, HIDDEN) . (TB, HIDDEN)^T -> (1, TB)
    # The result is lane-dense, so the store below is a contiguous row write
    # instead of the lane-sparse (TB, 1) masked-store path.
    v = lax.dot_general(
        w2_ref[...], h,
        dimension_numbers=(((1,), (1,)), ((), ())),
        preferred_element_type=jnp.float32,
    )
    o_ref[...] = (v + b2_ref[0]).astype(o_ref.dtype)   # b2 is a scalar read from SMEM


def _choose_tile(batch, block_b):
    """Pick (tile_rows, num_tiles) for the batch axis.

    Per-grid-step overhead dwarfs the per-tile work of a 5->128->1 head, so use
    as few steps as possible.  Tiles are multiples of 8 sublanes; when more
    than one tile is needed they are multiples of 128 so the lane-dense
    (1, tile) output block stays legal, and we aim for two even tiles so the
    "parallel" axis can shard across v7x's two TensorCores.
    """
    b8 = _round_up(max(batch, 1), _SUBLANE)
    if b8 <= 2 * _LANE:                 # small batch: a single resident tile
        return b8, 1
    cap = max(_round_up(block_b, _LANE), _LANE)
    half = _round_up(_cdiv(b8, 2), _LANE)   # two even tiles if they fit the cap
    tb = min(cap, half)
    return tb, _cdiv(batch, tb)


def value_forward(x, w1, b1, w2_row, b2, *, block_b=2048):
    """Value head forward: x (B, obs_dim) f32 -> (B,) f32.

    w1:     (obs_dim, HIDDEN)   (torch fc[0].weight.T)
    b1:     (1, HIDDEN)         (torch fc[0].bias[None, :])
    w2_row: (1, HIDDEN)         (torch fc[2].weight)
    b2:     (1,)                (torch fc[2].bias)
    """
    batch, obs_dim = x.shape
    hidden = w1.shape[1]

    tb, num_tiles = _choose_tile(batch, block_b)
    b_cover = num_tiles * tb    # >= batch; ragged last tile handled by Pallas OOB masking

    flops = 2 * b_cover * obs_dim * hidden + 2 * b_cover * hidden + 3 * b_cover * hidden
    bytes_accessed = (
        batch * obs_dim * x.dtype.itemsize           # x read (the only B-scaled input)
        + obs_dim * hidden * 4 + 2 * hidden * 4 + 4  # resident weights / biases
        + b_cover * 4                                # lane-dense output write
    )

    out = pl.pallas_call(
        value_kernel,
        out_shape=jax.ShapeDtypeStruct((1, b_cover), jnp.float32),
        grid_spec=pltpu.PrefetchScalarGridSpec(
            num_scalar_prefetch=0,
            grid=(num_tiles,),
            in_specs=[
                pl.BlockSpec((tb, obs_dim), lambda i: (i, 0)),      # x: tiled / pipelined
                pl.BlockSpec((obs_dim, hidden), lambda i: (0, 0)),  # w1: resident
                pl.BlockSpec((1, hidden), lambda i: (0, 0)),        # b1: resident
                pl.BlockSpec((1, hidden), lambda i: (0, 0)),        # w2 row: resident
                pl.BlockSpec(memory_space=pltpu.MemorySpace.SMEM),  # b2 scalar in SMEM
            ],
            out_specs=pl.BlockSpec((1, tb), lambda i: (0, i)),      # lane-dense output
        ),
        compiler_params=pltpu.CompilerParams(
            dimension_semantics=("parallel",),   # shard batch tiles across TCs (v7x)
        ),
        cost_estimate=pl.CostEstimate(
            flops=int(flops), transcendentals=0, bytes_accessed=int(bytes_accessed)
        ),
    )(x, w1, b1, w2_row, b2)

    # squeeze(-1) + drop rows past the real batch: (1, b_cover) -> (B,)
    return out[0, :batch]


def init_params(key):
    """Deterministic init mirroring torch.nn.Linear defaults
    (uniform(-1/sqrt(fan_in), 1/sqrt(fan_in)))."""
    k1, k2, k3, k4 = jax.random.split(key, 4)
    bound1 = 1.0 / jnp.sqrt(jnp.float32(OBS_DIM))
    bound2 = 1.0 / jnp.sqrt(jnp.float32(HIDDEN))
    w1 = jax.random.uniform(k1, (OBS_DIM, HIDDEN), jnp.float32, -bound1, bound1)
    b1 = jax.random.uniform(k2, (1, HIDDEN), jnp.float32, -bound1, bound1)
    w2_row = jax.random.uniform(k3, (1, HIDDEN), jnp.float32, -bound2, bound2)
    b2 = jax.random.uniform(k4, (1,), jnp.float32, -bound2, bound2)
    return w1, b1, w2_row, b2


def _reference(x, w1, b1, w2_row, b2):
    # Precision-unambiguous f32 reference: elementwise multiply + sum (VPU path),
    # independent of XLA's default f32 matmul precision on TPU.
    h = jnp.maximum(jnp.sum(x[:, :, None] * w1[None, :, :], axis=1) + b1, 0.0)
    return jnp.sum(h * w2_row, axis=-1) + b2[0]


if __name__ == "__main__":
    key = jax.random.PRNGKey(0)
    kx, kp, kb = jax.random.split(key, 3)

    # Small shape consistent with the module (obs_dim=5).
    batch = 8
    x = jax.random.normal(kx, (batch, OBS_DIM), jnp.float32)
    w1, b1, w2_row, b2 = init_params(kp)

    value = jax.block_until_ready(value_forward(x, w1, b1, w2_row, b2))
    ref = _reference(x, w1, b1, w2_row, b2)
    assert value.shape == (batch,)
    assert jnp.allclose(value, ref, atol=1e-4, rtol=1e-4), float(
        jnp.max(jnp.abs(value - ref)))

    # Multi-tile + ragged-edge path: 3 tiles of 128 rows, last tile partially OOB
    # (no jnp.pad copy; pad rows are discarded by the [:B] slice).
    big_b = 300
    xb = jax.random.normal(kb, (big_b, OBS_DIM), jnp.float32)
    vb = jax.block_until_ready(value_forward(xb, w1, b1, w2_row, b2, block_b=128))
    refb = _reference(xb, w1, b1, w2_row, b2)
    assert vb.shape == (big_b,)
    assert jnp.allclose(vb, refb, atol=1e-4, rtol=1e-4), float(
        jnp.max(jnp.abs(vb - refb)))

    print("KERNEL_OK")
</pallas_src>

<mosaic_0001>
module attributes {stable_mosaic.version = 11 : i64} {
  func.func @value_kernel(%arg0: i32, %arg1: memref<8x5xf32, #tpu.memory_space<vmem>>, %arg2: memref<5x128xf32, #tpu.memory_space<vmem>>, %arg3: memref<1x128xf32, #tpu.memory_space<vmem>>, %arg4: memref<1x128xf32, #tpu.memory_space<vmem>>, %arg5: memref<1xf32, #tpu.memory_space<smem>>, %arg6: memref<1x8xf32, #tpu.memory_space<vmem>>) attributes {dimension_semantics = [#tpu.dimension_semantics<parallel>], iteration_bounds = array<i64: 1>, scalar_prefetch = 0 : i64, scratch_operands = 0 : i64, tpu.core_type = #tpu.core_type<tc>, window_params = [{transform_indices = @transform_0, window_bounds = array<i64: 8, 5>}, {pipeline_mode = #tpu.pipeline_mode<synchronous>, transform_indices = @transform_1, window_bounds = array<i64: 5, 128>}, {pipeline_mode = #tpu.pipeline_mode<synchronous>, transform_indices = @transform_2, window_bounds = array<i64: 1, 128>}, {pipeline_mode = #tpu.pipeline_mode<synchronous>, transform_indices = @transform_3, window_bounds = array<i64: 1, 128>}, {transform_indices = @transform_4, window_bounds = array<i64: 1>}, {transform_indices = @transform_5, window_bounds = array<i64: 1, 8>}]} {
    %c0 = arith.constant 0 : index
    %c0_0 = arith.constant 0 : index
    %0 = vector.load %arg1[%c0, %c0_0] : memref<8x5xf32, #tpu.memory_space<vmem>>, vector<8x5xf32>
    %c0_1 = arith.constant 0 : index
    %c0_2 = arith.constant 0 : index
    %1 = vector.load %arg2[%c0_1, %c0_2] : memref<5x128xf32, #tpu.memory_space<vmem>>, vector<5x128xf32>
    %cst = arith.constant dense<0.000000e+00> : vector<8x128xf32>
    %2 = tpu.matmul %0, %1, %cst {dimension_numbers = #tpu.dot_dimension_numbers<[1], [0], [0], [1], [0, 0, 1, 1], [], []>} : vector<8x5xf32>, vector<5x128xf32>, vector<8x128xf32> -> vector<8x128xf32>
    %c0_3 = arith.constant 0 : index
    %c0_4 = arith.constant 0 : index
    %3 = vector.load %arg3[%c0_3, %c0_4] : memref<1x128xf32, #tpu.memory_space<vmem>>, vector<1x128xf32>
    %4 = vector.broadcast %3 : vector<1x128xf32> to vector<8x128xf32>
    %5 = arith.addf %2, %4 : vector<8x128xf32>
    %cst_5 = arith.constant 0.000000e+00 : f32
    %6 = vector.broadcast %cst_5 : f32 to vector<8x128xf32>
    %7 = arith.maximumf %5, %6 : vector<8x128xf32>
    %c0_6 = arith.constant 0 : index
    %c0_7 = arith.constant 0 : index
    %8 = vector.load %arg4[%c0_6, %c0_7] : memref<1x128xf32, #tpu.memory_space<vmem>>, vector<1x128xf32>
    %cst_8 = arith.constant dense<0.000000e+00> : vector<1x8xf32>
    %9 = tpu.matmul %8, %7, %cst_8 {dimension_numbers = #tpu.dot_dimension_numbers<[1], [1], [0], [0], [0, 0, 1, 0], [], []>} : vector<1x128xf32>, vector<8x128xf32>, vector<1x8xf32> -> vector<1x8xf32>
    %c0_9 = arith.constant 0 : index
    %10 = memref.load %arg5[%c0_9] : memref<1xf32, #tpu.memory_space<smem>>
    %11 = vector.broadcast %10 : f32 to vector<1x8xf32>
    %12 = arith.addf %9, %11 : vector<1x8xf32>
    %c0_10 = arith.constant 0 : index
    %c0_11 = arith.constant 0 : index
    %13 = vector.load %arg6[%c0_10, %c0_11] : memref<1x8xf32, #tpu.memory_space<vmem>>, vector<1x8xf32>
    tpu.vector_store %arg6[%c0_10, %c0_11], %12 {strides = array<i32>} : memref<1x8xf32, #tpu.memory_space<vmem>>, vector<1x8xf32>,
    return
  }
  func.func @transform_0(%arg0: i32) -> (i32, i32) {
    %c0_i32 = arith.constant 0 : i32
    %c0_i32_0 = arith.constant 0 : i32
    return %arg0, %c0_i32 : i32, i32
  }
  func.func @transform_1(%arg0: i32) -> (i32, i32) {
    %c0_i32 = arith.constant 0 : i32
    %c0_i32_0 = arith.constant 0 : i32
    %c0_i32_1 = arith.constant 0 : i32
    return %c0_i32, %c0_i32_0 : i32, i32
  }
  func.func @transform_2(%arg0: i32) -> (i32, i32) {
    %c0_i32 = arith.constant 0 : i32
    %c0_i32_0 = arith.constant 0 : i32
    %c0_i32_1 = arith.constant 0 : i32
    return %c0_i32, %c0_i32_0 : i32, i32
  }
  func.func @transform_3(%arg0: i32) -> (i32, i32) {
    %c0_i32 = arith.constant 0 : i32
    %c0_i32_0 = arith.constant 0 : i32
    %c0_i32_1 = arith.constant 0 : i32
    return %c0_i32, %c0_i32_0 : i32, i32
  }
  func.func @transform_4(%arg0: i32) -> i32 {
    %c0_i32 = arith.constant 0 : i32
    %c0_i32_0 = arith.constant 0 : i32
    return %c0_i32 : i32
  }
  func.func @transform_5(%arg0: i32) -> (i32, i32) {
    %c0_i32 = arith.constant 0 : i32
    %c0_i32_0 = arith.constant 0 : i32
    return %c0_i32, %arg0 : i32, i32
  }
}

</mosaic_0001>

<llo_original>
// kernel: tpu_custom_call.1
$region0: #{tpu_custom_call.1}
  #allocation0 [shape = 'u32[]', space=smem, size = 0x4, offset = 0x4, fixed_abs, tag = 'smem constant byte address 0x4 - core index']
  #allocation1 [shape = 'u32[144,128]{1,0:T(1,128)}', space=vmem, size = 0x12000, scoped, tag = 'internal scratch']
  #allocation2 [shape = 'f32[1]{0:T(128)S(6)}', space=smem, size = 0x200, scoped, tag = 'scoped memory for tpu_custom_call.1']
  %s0 = inlined_call_operand.hbm [shape: f32[8,5], index: 0, kind: input, shape index: {}]
  %s1 = inlined_call_operand.hbm [shape: f32[5,128], index: 1, kind: input, shape index: {}]
  %s2 = inlined_call_operand.vmem [shape: f32[1,128], index: 2, kind: input, shape index: {}]
  %s3 = inlined_call_operand.vmem [shape: f32[1,128], index: 3, kind: input, shape index: {}]
  %s4 = inlined_call_operand.<no memory space> [shape: f32[1], index: 4, kind: input, shape index: {}]
  %s5 = inlined_call_operand.hbm [shape: f32[1,8], index: 5, kind: output, shape index: {}]
  %s6 = sld [smem:[#allocation0]]
  $region38: #{tpu_custom_call.1} parent=0
    _
  %s8 = ssub.s32 1, %s6
  %s9 = scalar_select 0, %s8, %s6
  %10 = sst [smem:[#allocation2]] %s4
  $region1: #{tpu_custom_call.1} parent=0
    #allocation3 [shape = 'u8[4096]{0}', space=vmem, size = 0x1000, scoped, tag = 'input window, operand 0, single buffered']
    #allocation4 [shape = 's32[1]{0}', space=sflag, size = 0x4, scoped, tag = 'scoped memory for tpu_custom_call.1']
    #allocation5 [shape = 's32[1]{0}', space=sflag, size = 0x4, scoped, tag = 'scoped memory for tpu_custom_call.1']
    #allocation6 [shape = 'u8[4096]{0}', space=vmem, size = 0x1000, scoped, tag = 'input window, operand 1, single buffered']
    #allocation7 [shape = 's32[1]{0}', space=sflag, size = 0x4, scoped, tag = 'scoped memory for tpu_custom_call.1']
    #allocation8 [shape = 'u8[512]{0}', space=vmem, size = 0x400, scoped, tag = 'output window, operand 0, single buffered']
    %11 = vsyncpa [#allocation4], 0
    %12 = vsyncpa [#allocation7], 0
    %13 = vsyncpa [#allocation5], 0
    // Predicated region
    $region2: #{tpu_custom_call.1} parent=1 // pred_check
      _
    $region3: #{tpu_custom_call.1} parent=1 // pred_check_branch
      %15 = sbr.rel (0) target = $region5
    $region4: #{tpu_custom_call.1} parent=1 // pred_region
      %s17 = ssub.s32 128, 128
      %18 = vsyncadd [#allocation4], %s17
      %s20 = sshll.u32 [#allocation3], 4
      %s21 = int_to_ptr.vmem [resolvable:$true] %s20
      %23 = dma.hbm_to_vmem [thread:$0]  %s0, 128, %s21, [#allocation4]
    $region5: #{tpu_custom_call.1} parent=1 // pred_fallthru
      _
    // Predicated region
    $region6: #{tpu_custom_call.1} parent=1 // pred_check
      _
    $region7: #{tpu_custom_call.1} parent=1 // pred_check_branch
      %25 = sbr.rel (0) target = $region9
    $region8: #{tpu_custom_call.1} parent=1 // pred_region
      %s27 = ssub.s32 128, 128
      %28 = vsyncadd [#allocation7], %s27
      %s30 = sshll.u32 [#allocation6], 4
      %s31 = int_to_ptr.vmem [resolvable:$true] %s30
      %33 = dma.hbm_to_vmem [thread:$0]  %s1, 128, %s31, [#allocation7]
    $region9: #{tpu_custom_call.1} parent=1 // pred_fallthru
      _
    // Predicated region
    $region10: #{tpu_custom_call.1} parent=1 // pred_check
      _
    $region11: #{tpu_custom_call.1} parent=1 // pred_check_branch
      %35 = sbr.rel (0) target = $region13
    $region12: #{tpu_custom_call.1} parent=1 // pred_region
      _
    $region13: #{tpu_custom_call.1} parent=1 // pred_fallthru
      _
    // Predicated region
    $region14: #{tpu_custom_call.1} parent=1 // pred_check
      _
    $region15: #{tpu_custom_call.1} parent=1 // pred_check_branch
      %37 = sbr.rel (0) target = $region17
    $region16: #{tpu_custom_call.1} parent=1 // pred_region
      _
    $region17: #{tpu_custom_call.1} parent=1 // pred_fallthru
      _
    // Predicated region
    $region18: #{tpu_custom_call.1} parent=1 // pred_check
      _
    $region19: #{tpu_custom_call.1} parent=1 // pred_check_branch
      %39 = sbr.rel (0) target = $region21
    $region20: #{tpu_custom_call.1} parent=1 // pred_region
      _
    $region21: #{tpu_custom_call.1} parent=1 // pred_fallthru
      _
    // Predicated region
    $region22: #{tpu_custom_call.1} parent=1 // pred_check
      _
    $region23: #{tpu_custom_call.1} parent=1 // pred_check_branch
      %41 = sbr.rel (0) target = $region25
    $region24: #{tpu_custom_call.1} parent=1 // pred_region
      %42 = dma.done [#allocation4], 128
    $region25: #{tpu_custom_call.1} parent=1 // pred_fallthru
      _
    // Predicated region
    $region26: #{tpu_custom_call.1} parent=1 // pred_check
      _
    $region27: #{tpu_custom_call.1} parent=1 // pred_check_branch
      %44 = sbr.rel (0) target = $region29
    $region28: #{tpu_custom_call.1} parent=1 // pred_region
      %45 = dma.done [#allocation7], 128
    $region29: #{tpu_custom_call.1} parent=1 // pred_fallthru
      _
    %v46 = vld [vmem:[#allocation3] sm:$0xff]
    %v47 = vld [vmem:[#allocation6] sm:$0x1f]
    %v48 = vld [vmem:[%s2] sm:$0x1]
    %v50 = vlaneseq
    %v51 = vshrl.u32 %v50, 7
    %v52 = vsub.s32 0, %v51
    %v53 = vrot.slane %v48, %v52
    %vm55 = vcmask 39936
    %v57 = vsel %vm55, %v46, 0
    %vm59 = vcmask 1044480
    %v61 = vsel %vm59, %v47, 0
    %63 = vmatprep.subr.mxu0 0.0
    %64 = vmatpush1.msra.mxu0 %v61
    %65 = vmatprep.subr.mxu0 0.0
    %66 = vmatpush1.msra.mxu0 0.0
    %67 = vmatprep.subr.mxu0 0.0
    %68 = vmatpush1.msra.mxu0 0.0
    %69 = vmatprep.subr.mxu0 0.0
    %70 = vmatpush1.msra.mxu0 0.0
    %71 = vmatprep.subr.mxu0 0.0
    %72 = vmatpush1.msra.mxu0 0.0
    %73 = vmatprep.subr.mxu0 0.0
    %74 = vmatpush1.msra.mxu0 0.0
    %75 = vmatprep.subr.mxu0 0.0
    %76 = vmatpush1.msra.mxu0 0.0
    %77 = vmatprep.subr.mxu0 0.0
    %78 = vmatpush1.msra.mxu0 0.0
    %79 = vmatprep.subr.mxu0 0.0
    %80 = vmatpush1.msra.mxu0 0.0
    %81 = vmatprep.subr.mxu0 0.0
    %82 = vmatpush1.msra.mxu0 0.0
    %83 = vmatprep.subr.mxu0 0.0
    %84 = vmatpush1.msra.mxu0 0.0
    %85 = vmatprep.subr.mxu0 0.0
    %86 = vmatpush1.msra.mxu0 0.0
    %87 = vmatprep.subr.mxu0 0.0
    %88 = vmatpush1.msra.mxu0 0.0
    %89 = vmatprep.subr.mxu0 0.0
    %90 = vmatpush1.msra.mxu0 0.0
    %91 = vmatprep.subr.mxu0 0.0
    %92 = vmatpush1.msra.mxu0 0.0
    %93 = vmatprep.subr.mxu0 0.0
    %94 = vmatpush1.msra.mxu0 0.0
    %95 = vmatprep.subr.mxu0 0.0
    %96 = vmatpush1.msra.mxu0 0.0
    %97 = vmatprep.subr.mxu0 0.0
    %98 = vmatpush1.msra.mxu0 0.0
    %99 = vmatprep.subr.mxu0 0.0
    %100 = vmatpush1.msra.mxu0 0.0
    %101 = vmatprep.subr.mxu0 0.0
    %102 = vmatpush1.msra.mxu0 0.0
    %103 = vmatprep.subr.mxu0 0.0
    %104 = vmatpush1.msra.mxu0 0.0
    %105 = vmatprep.subr.mxu0 0.0
    %106 = vmatpush1.msra.mxu0 0.0
    %107 = vmatprep.subr.mxu0 0.0
    %108 = vmatpush1.msra.mxu0 0.0
    %109 = vmatprep.subr.mxu0 0.0
    %110 = vmatpush1.msra.mxu0 0.0
    %111 = vmatprep.subr.mxu0 0.0
    %112 = vmatpush1.msra.mxu0 0.0
    %113 = vmatprep.subr.mxu0 0.0
    %114 = vmatpush1.msra.mxu0 0.0
    %115 = vmatprep.subr.mxu0 0.0
    %116 = vmatpush1.msra.mxu0 0.0
    %117 = vmatprep.subr.mxu0 0.0
    %118 = vmatpush1.msra.mxu0 0.0
    %119 = vmatprep.subr.mxu0 0.0
    %120 = vmatpush1.msra.mxu0 0.0
    %121 = vmatprep.subr.mxu0 0.0
    %122 = vmatpush1.msra.mxu0 0.0
    %123 = vmatprep.subr.mxu0 0.0
    %124 = vmatpush1.msra.mxu0 0.0
    %125 = vmatprep.subr.mxu0 0.0
    %126 = vmatpush1.msra.mxu0 0.0
    %127 = vmatprep.mubr.f32.mxu0 0.0
    %128 = vmatmul.mubr.f32.gmra.mrb[0].mxu0 %v57
    %v129 = vpop.f32.mrb[0].mxu0
    %v130 = vadd.f32 %v53, %v129
    %v131 = vpop.f32.mrb[0].mxu0
    %132 = vdwg.mxu0
    %v133 = vmax.f32 %v130, 0.0
    %v134 = vld [vmem:[%s3] sm:$0x1]
    %s135 = sld [smem:[#allocation2]]
    %v136 = vstv %s135
    %137 = vmatprep.subr.mxu0 0.0
    %138 = vmatpush1.xpose.msra.mxu0 %v133
    %139 = vmatprep.subr.mxu0 0.0
    %140 = vmatpush1.xpose.msra.mxu0 0.0
    %141 = vmatprep.subr.mxu0 0.0
    %142 = vmatpush1.xpose.msra.mxu0 0.0
    %143 = vmatprep.subr.mxu0 0.0
    %144 = vmatpush1.xpose.msra.mxu0 0.0
    %145 = vmatprep.subr.mxu0 0.0
    %146 = vmatpush1.xpose.msra.mxu0 0.0
    %147 = vmatprep.subr.mxu0 0.0
    %148 = vmatpush1.xpose.msra.mxu0 0.0
    %149 = vmatprep.subr.mxu0 0.0
    %150 = vmatpush1.xpose.msra.mxu0 0.0
    %151 = vmatprep.subr.mxu0 0.0
    %152 = vmatpush1.xpose.msra.mxu0 0.0
    %153 = vmatprep.subr.mxu0 0.0
    %154 = vmatpush1.xpose.msra.mxu0 0.0
    %155 = vmatprep.subr.mxu0 0.0
    %156 = vmatpush1.xpose.msra.mxu0 0.0
    %157 = vmatprep.subr.mxu0 0.0
    %158 = vmatpush1.xpose.msra.mxu0 0.0
    %159 = vmatprep.subr.mxu0 0.0
    %160 = vmatpush1.xpose.msra.mxu0 0.0
    %161 = vmatprep.subr.mxu0 0.0
    %162 = vmatpush1.xpose.msra.mxu0 0.0
    %163 = vmatprep.subr.mxu0 0.0
    %164 = vmatpush1.xpose.msra.mxu0 0.0
    %165 = vmatprep.subr.mxu0 0.0
    %166 = vmatpush1.xpose.msra.mxu0 0.0
    %167 = vmatprep.subr.mxu0 0.0
    %168 = vmatpush1.xpose.msra.mxu0 0.0
    %169 = vmatprep.subr.mxu0 0.0
    %170 = vmatpush1.xpose.msra.mxu0 0.0
    %171 = vmatprep.subr.mxu0 0.0
    %172 = vmatpush1.xpose.msra.mxu0 0.0
    %173 = vmatprep.subr.mxu0 0.0
    %174 = vmatpush1.xpose.msra.mxu0 0.0
    %175 = vmatprep.subr.mxu0 0.0
    %176 = vmatpush1.xpose.msra.mxu0 0.0
    %177 = vmatprep.subr.mxu0 0.0
    %178 = vmatpush1.xpose.msra.mxu0 0.0
    %179 = vmatprep.subr.mxu0 0.0
    %180 = vmatpush1.xpose.msra.mxu0 0.0
    %181 = vmatprep.subr.mxu0 0.0
    %182 = vmatpush1.xpose.msra.mxu0 0.0
    %183 = vmatprep.subr.mxu0 0.0
    %184 = vmatpush1.xpose.msra.mxu0 0.0
    %185 = vmatprep.subr.mxu0 0.0
    %186 = vmatpush1.xpose.msra.mxu0 0.0
    %187 = vmatprep.subr.mxu0 0.0
    %188 = vmatpush1.xpose.msra.mxu0 0.0
    %189 = vmatprep.subr.mxu0 0.0
    %190 = vmatpush1.xpose.msra.mxu0 0.0
    %191 = vmatprep.subr.mxu0 0.0
    %192 = vmatpush1.xpose.msra.mxu0 0.0
    %193 = vmatprep.subr.mxu0 0.0
    %194 = vmatpush1.xpose.msra.mxu0 0.0
    %195 = vmatprep.subr.mxu0 0.0
    %196 = vmatpush1.xpose.msra.mxu0 0.0
    %197 = vmatprep.subr.mxu0 0.0
    %198 = vmatpush1.xpose.msra.mxu0 0.0
    %199 = vmatprep.subr.mxu0 0.0
    %200 = vmatpush1.xpose.msra.mxu0 0.0
    %201 = vmatprep.mubr.f32.mxu0 0.0
    %202 = vmatmul.mubr.f32.gmra.mrb[0].mxu0 %v134
    %v203 = vpop.f32.mrb[0].mxu0
    %v204 = vadd.f32 %v136, %v203
    %v205 = vpop.f32.mrb[0].mxu0
    %206 = vdwg.mxu0
    %vm207 = vcmask 57344
    %208 = vst.msk [vmem:[#allocation8] sm:$0x1] %vm207, %v204
    // Predicated region
    $region30: #{tpu_custom_call.1} parent=1 // pred_check
      _
    $region31: #{tpu_custom_call.1} parent=1 // pred_check_branch
      %210 = sbr.rel (0) target = $region33
    $region32: #{tpu_custom_call.1} parent=1 // pred_region
      %s212 = ssub.s32 16, 16
      %213 = vsyncadd [#allocation5], %s212
      %s215 = sshll.u32 [#allocation8], 4
      %s216 = int_to_ptr.vmem [resolvable:$true] %s215
      %218 = dma.vmem_to_hbm [thread:$0]  %s216, 16, %s5, [#allocation5]
    $region33: #{tpu_custom_call.1} parent=1 // pred_fallthru
      _
    // Predicated region
    $region34: #{tpu_custom_call.1} parent=1 // pred_check
      _
    $region35: #{tpu_custom_call.1} parent=1 // pred_check_branch
      %220 = sbr.rel (0) target = $region37
    $region36: #{tpu_custom_call.1} parent=1 // pred_region
      %221 = dma.done [#allocation5], 16
    $region37: #{tpu_custom_call.1} parent=1 // pred_fallthru
      _
    %222 = vsyncpa [#allocation4], 1
    %223 = vsyncpa [#allocation7], 1
    %224 = vsyncpa [#allocation5], 1

</llo_original>
